<compile_context>
chip_gen: v6e
topology: v6e:2x2x1
jax: 0.10.0
libtpu: 0.0.40
codegen_flags: <defaults>
</compile_context>

<pallas_src>
import functools

import jax
import jax.numpy as jnp
from jax import lax
from jax.experimental import pallas as pl
from jax.experimental.pallas import tpu as pltpu

EPS = 1e-5  # PyTorch BatchNorm2d default


def _conv_tile(x_ref, w_ref, acc_ref, *, th, wo, c4):
    """Conv for one row tile: one K-folded MXU dot into a VMEM scratch accumulator.

    x_ref : (1, 1, th+1, wo+1, c4) bf16  space-to-depth tile (+1 halo row/col), c4 = 4*Cin
    w_ref : (4*c4, Cpad)           bf16  cell-packed 3x3 weights (zero-padded taps/lanes)
    acc_ref: (th*wo, Cpad)         f32   VMEM scratch holding the conv result
    """
    xl = x_ref[0, 0]                                     # (th+1, wo+1, c4) bf16
    # Gather the 2x2 neighbor cells into one K-major slab: K = 4*c4 = 16*Cin.
    slab = jnp.concatenate(
        [xl[a:a + th, b:b + wo, :].reshape(th * wo, c4)
         for a in (0, 1) for b in (0, 1)],
        axis=-1)                                         # (th*wo, 4*c4) bf16
    acc_ref[...] = jnp.dot(slab, w_ref[...], preferred_element_type=jnp.float32)


def _conv_stats_kernel(x_ref, w_ref, stats_ref, acc_ref, *, th, wo, c4):
    """Phase 1: conv tile + per-tile BN partials (sum, sumsq) in a single output DMA."""
    _conv_tile(x_ref, w_ref, acc_ref, th=th, wo=wo, c4=c4)
    y = acc_ref[...]                                     # (th*wo, Cpad) f32
    s = jnp.sum(y, axis=0, keepdims=True)                # (1, Cpad)
    ss = jnp.sum(y * y, axis=0, keepdims=True)           # (1, Cpad)
    stats_ref[0, 0] = jnp.concatenate([s, ss], axis=0)   # (2, Cpad)


def _conv_bn_relu_kernel(x_ref, w_ref, scale_ref, shift_ref, o_ref, acc_ref,
                         *, th, wo, c4):
    """Phase 2: recompute conv tile, apply fused BN (scale/shift) + ReLU, lane-dense store."""
    _conv_tile(x_ref, w_ref, acc_ref, th=th, wo=wo, c4=c4)
    y = acc_ref[...]                                     # (th*wo, Cpad) f32
    o_ref[0, 0] = jnp.maximum(y * scale_ref[...] + shift_ref[...], 0.0).astype(o_ref.dtype)


def _vmem_limit_bytes():
    """Per-generation VMEM budget (v7x has 64 MiB physical vs 128 MiB on v5e/v6e)."""
    try:
        cap = int(pltpu.get_tpu_info().vmem_capacity_bytes)
    except Exception:  # interpret mode / older jax — assume the smallest (v7x) budget
        cap = 64 * 1024 * 1024
    return int(min(cap * 3 // 4, 96 * 1024 * 1024))


@jax.jit
def conv_downsample(x_nchw, w_hwio, bias, gamma, beta):
    """ConvDownsample forward (Conv2d 3x3 s2 p1 + BatchNorm2d train mode + ReLU).

    x_nchw : (N, Cin, H, W) f32;  w_hwio : (3, 3, Cin, Cout);  bias/gamma/beta : (Cout,)
    returns (N, Cout, Ho, Wo) f32 (NCHW, like the PyTorch module).

    `bias` is accepted for interface parity but intentionally unused: train-mode
    BatchNorm subtracts the batch mean, which cancels a per-channel conv bias exactly.
    """
    del bias
    N, Cin, H, W = x_nchw.shape
    KH, KW, _, Cout = w_hwio.shape
    Ho = (H + 2 - KH) // 2 + 1
    Wo = (W + 2 - KW) // 2 + 1
    M = Ho * Wo
    Cpad = max(128, ((Cout + 127) // 128) * 128)          # lane-dense output channels
    C4 = 4 * Cin                                          # phases*Cin minor dim

    # --- spatial M tiling: ~512 output positions per grid step (bounded VMEM, enough
    #     steps for the DMA pipeline).  Padded output rows beyond Ho see only zero
    #     input -> conv output exactly 0 (no bias) -> contribute nothing to the stats.
    TH = max(1, min(Ho, 512 // max(Wo, 1)))
    n_th = -(-Ho // TH)                                   # ceil div
    Ho_pad = n_th * TH
    Hs, Ws = Ho_pad + 1, Wo + 1                           # s2d cell extents (incl. halo)

    # --- preprocessing: one pad + one transpose (space-to-depth, phases*Cin minor).
    pad_h = 2 * Hs - H - 1
    pad_w = 2 * Ws - W - 1
    xp = jnp.pad(x_nchw.astype(jnp.bfloat16),
                 ((0, 0), (0, 0), (1, pad_h), (1, pad_w)))        # (N, Cin, 2*Hs, 2*Ws)
    xs2d = xp.reshape(N, Cin, Hs, 2, Ws, 2)
    xs2d = xs2d.transpose(0, 2, 4, 3, 5, 1).reshape(N, Hs, Ws, C4)
    # Overlapping row tiles with their +1 halo row, laid out so BlockSpecs stay disjoint.
    xtiles = jnp.stack([xs2d[:, t * TH: t * TH + TH + 1] for t in range(n_th)], axis=1)
    # xtiles: (N, n_th, TH+1, Ws, C4) bf16

    # --- cell-packed weights: one (4*C4, Cpad) matrix so the conv is a single K-folded dot.
    #     Cell (a, b) holds tap (2a+rp, 2b+cp) at K-row (rp*2+cp)*Cin + ci (zero if tap OOB).
    wc = jnp.zeros((2, 2, C4, Cpad), jnp.float32)
    for a in range(2):
        for b in range(2):
            for rp in range(2):
                for cp in range(2):
                    kh, kw = 2 * a + rp, 2 * b + cp
                    if kh < KH and kw < KW:
                        p0 = (rp * 2 + cp) * Cin
                        wc = wc.at[a, b, p0:p0 + Cin, :Cout].set(
                            w_hwio[kh, kw].astype(jnp.float32))
    wc_flat = wc.reshape(4 * C4, Cpad).astype(jnp.bfloat16)

    gamma_pad = jnp.zeros((Cpad,), jnp.float32).at[:Cout].set(gamma.astype(jnp.float32))
    beta_pad = jnp.zeros((Cpad,), jnp.float32).at[:Cout].set(beta.astype(jnp.float32))

    cparams = pltpu.CompilerParams(
        # Both axes parallel: no cross-step accumulation, so v7x's two TensorCores get
        # work even when N == 1 or N is odd.
        dimension_semantics=("parallel", "parallel"),
        vmem_limit_bytes=_vmem_limit_bytes(),
    )
    grid = (N, n_th)

    # --- Phase 1: conv tile -> per-(image, tile) BN partials only (no y round trip).
    #     TODO(synk): sweep pl.Buffered(3) on the input spec on v7x if the trace shows
    #     exposed DMA.
    stats = pl.pallas_call(
        functools.partial(_conv_stats_kernel, th=TH, wo=Wo, c4=C4),
        grid=grid,
        in_specs=[
            pl.BlockSpec((1, 1, TH + 1, Ws, C4), lambda n, t: (n, t, 0, 0, 0)),
            pl.BlockSpec((4 * C4, Cpad), lambda n, t: (0, 0)),
        ],
        out_specs=pl.BlockSpec((1, 1, 2, Cpad), lambda n, t: (n, t, 0, 0)),
        out_shape=jax.ShapeDtypeStruct((N, n_th, 2, Cpad), jnp.float32),
        scratch_shapes=[pltpu.VMEM((TH * Wo, Cpad), jnp.float32)],
        compiler_params=cparams,
    )(xtiles, wc_flat)

    # --- Fold partials into per-channel scale/shift (tiny (Cpad,) f32 math).
    count = jnp.float32(N * M)                       # true count; padded rows contribute 0
    tot = jnp.sum(stats, axis=(0, 1))                # (2, Cpad)
    mean = tot[0] / count
    var = jnp.maximum(tot[1] / count - mean * mean, 0.0)
    scale = gamma_pad * lax.rsqrt(var + EPS)
    shift = beta_pad - mean * scale
    scale2 = scale.reshape(1, Cpad)
    shift2 = shift.reshape(1, Cpad)

    # --- Phase 2: recompute conv tile, fused BN + ReLU, lane-dense f32 store.
    out = pl.pallas_call(
        functools.partial(_conv_bn_relu_kernel, th=TH, wo=Wo, c4=C4),
        grid=grid,
        in_specs=[
            pl.BlockSpec((1, 1, TH + 1, Ws, C4), lambda n, t: (n, t, 0, 0, 0)),
            pl.BlockSpec((4 * C4, Cpad), lambda n, t: (0, 0)),
            pl.BlockSpec((1, Cpad), lambda n, t: (0, 0)),
            pl.BlockSpec((1, Cpad), lambda n, t: (0, 0)),
        ],
        out_specs=pl.BlockSpec((1, 1, TH * Wo, Cpad), lambda n, t: (n, t, 0, 0)),
        out_shape=jax.ShapeDtypeStruct((N, n_th, TH * Wo, Cpad), jnp.float32),
        scratch_shapes=[pltpu.VMEM((TH * Wo, Cpad), jnp.float32)],
        compiler_params=cparams,
    )(xtiles, wc_flat, scale2, shift2)

    # Slice away row/lane padding and return NCHW to match the PyTorch module.
    out = out.reshape(N, Ho_pad, Wo, Cpad)[:, :Ho, :, :Cout]
    return jnp.transpose(out, (0, 3, 1, 2))


@jax.jit
def reference(x_nchw, w_hwio, bias, gamma, beta):
    """Pure-JAX reference (same semantics as the PyTorch module in train mode)."""
    y = lax.conv_general_dilated(
        jnp.transpose(x_nchw, (0, 2, 3, 1)), w_hwio,
        window_strides=(2, 2), padding=((1, 1), (1, 1)),
        dimension_numbers=("NHWC", "HWIO", "NHWC"))
    y = y + bias
    mean = jnp.mean(y, axis=(0, 1, 2), keepdims=True)
    var = jnp.mean((y - mean) ** 2, axis=(0, 1, 2), keepdims=True)
    y = (y - mean) / jnp.sqrt(var + EPS) * gamma + beta
    y = jnp.maximum(y, 0.0)
    return jnp.transpose(y, (0, 3, 1, 2))


if __name__ == "__main__":
    # Small shapes consistent with the module: NCHW input.
    N, Cin, H, W = 2, 4, 16, 16
    Cout = 8

    key = jax.random.PRNGKey(0)
    kx, kw, kb, kg, kbe = jax.random.split(key, 5)

    # Pre-quantize x and w to bf16-representable values so the bf16-operand kernel path
    # and the f32 reference see identical operands (only accumulation-order differences
    # remain).  Real f32 inputs would carry the usual ~0.3-0.5% bf16 operand error.
    x = jax.random.normal(kx, (N, Cin, H, W), dtype=jnp.float32)
    x = x.astype(jnp.bfloat16).astype(jnp.float32)

    fan_in = Cin * 3 * 3
    bound = 1.0 / jnp.sqrt(jnp.float32(fan_in))
    w = jax.random.uniform(kw, (3, 3, Cin, Cout), jnp.float32, -bound, bound)
    w = w.astype(jnp.bfloat16).astype(jnp.float32)
    b = jax.random.uniform(kb, (Cout,), jnp.float32, -bound, bound)
    gamma = jnp.ones((Cout,), jnp.float32) + 0.1 * jax.random.normal(kg, (Cout,))
    beta = 0.1 * jax.random.normal(kbe, (Cout,))

    out = jax.block_until_ready(conv_downsample(x, w, b, gamma, beta))
    ref = jax.block_until_ready(reference(x, w, b, gamma, beta))

    assert out.shape == (N, Cout, H // 2, W // 2), out.shape
    max_err = float(jnp.max(jnp.abs(out - ref)))
    assert jnp.allclose(out, ref, atol=2e-3, rtol=2e-3), max_err

    print("KERNEL_OK")
</pallas_src>

<mosaic_0001>
module attributes {stable_mosaic.version = 11 : i64} {
  func.func @_conv_stats_kernel(%arg0: i32, %arg1: i32, %arg2: memref<1x1x9x9x16xbf16, #tpu.memory_space<vmem>>, %arg3: memref<64x128xbf16, #tpu.memory_space<vmem>>, %arg4: memref<1x1x2x128xf32, #tpu.memory_space<vmem>>, %arg5: memref<64x128xf32, #tpu.memory_space<vmem>>) attributes {dimension_semantics = [#tpu.dimension_semantics<parallel>, #tpu.dimension_semantics<parallel>], iteration_bounds = array<i64: 2, 1>, scalar_prefetch = 0 : i64, scratch_operands = 1 : i64, tpu.core_type = #tpu.core_type<tc>, window_params = [{transform_indices = @transform_0, window_bounds = array<i64: 1, 1, 9, 9, 16>}, {pipeline_mode = #tpu.pipeline_mode<synchronous>, transform_indices = @transform_1, window_bounds = array<i64: 64, 128>}, {transform_indices = @transform_2, window_bounds = array<i64: 1, 1, 2, 128>}]} {
    %c0 = arith.constant 0 : index
    %c0_0 = arith.constant 0 : index
    %c0_1 = arith.constant 0 : index
    %c0_2 = arith.constant 0 : index
    %c0_3 = arith.constant 0 : index
    %0 = vector.load %arg2[%c0, %c0_0, %c0_1, %c0_2, %c0_3] : memref<1x1x9x9x16xbf16, #tpu.memory_space<vmem>>, vector<1x1x9x9x16xbf16>
    %1 = vector.shape_cast %0 : vector<1x1x9x9x16xbf16> to vector<9x9x16xbf16>
    %2 = vector.extract_strided_slice %1 {offsets = [0, 0, 0], sizes = [8, 8, 16], strides = [1, 1, 1]} : vector<9x9x16xbf16> to vector<8x8x16xbf16>
    %3 = vector.shape_cast %2 : vector<8x8x16xbf16> to vector<64x16xbf16>
    %4 = vector.extract_strided_slice %1 {offsets = [0, 1, 0], sizes = [8, 8, 16], strides = [1, 1, 1]} : vector<9x9x16xbf16> to vector<8x8x16xbf16>
    %5 = vector.shape_cast %4 : vector<8x8x16xbf16> to vector<64x16xbf16>
    %6 = vector.extract_strided_slice %1 {offsets = [1, 0, 0], sizes = [8, 8, 16], strides = [1, 1, 1]} : vector<9x9x16xbf16> to vector<8x8x16xbf16>
    %7 = vector.shape_cast %6 : vector<8x8x16xbf16> to vector<64x16xbf16>
    %8 = vector.extract_strided_slice %1 {offsets = [1, 1, 0], sizes = [8, 8, 16], strides = [1, 1, 1]} : vector<9x9x16xbf16> to vector<8x8x16xbf16>
    %9 = vector.shape_cast %8 : vector<8x8x16xbf16> to vector<64x16xbf16>
    %10 = tpu.concatenate %3, %5, %7, %9 in 1 : vector<64x16xbf16>, vector<64x16xbf16>, vector<64x16xbf16>, vector<64x16xbf16> -> vector<64x64xbf16>
    %c0_4 = arith.constant 0 : index
    %c0_5 = arith.constant 0 : index
    %11 = vector.load %arg3[%c0_4, %c0_5] : memref<64x128xbf16, #tpu.memory_space<vmem>>, vector<64x128xbf16>
    %cst = arith.constant dense<0.000000e+00> : vector<64x128xf32>
    %12 = tpu.matmul %10, %11, %cst {dimension_numbers = #tpu.dot_dimension_numbers<[1], [0], [0], [1], [0, 0, 1, 1], [], []>} : vector<64x64xbf16>, vector<64x128xbf16>, vector<64x128xf32> -> vector<64x128xf32>
    %c0_6 = arith.constant 0 : index
    %c0_7 = arith.constant 0 : index
    %13 = vector.load %arg5[%c0_6, %c0_7] : memref<64x128xf32, #tpu.memory_space<vmem>>, vector<64x128xf32>
    tpu.vector_store %arg5[%c0_6, %c0_7], %12 {strides = array<i32>} : memref<64x128xf32, #tpu.memory_space<vmem>>, vector<64x128xf32>,
    %c0_8 = arith.constant 0 : index
    %c0_9 = arith.constant 0 : index
    %14 = vector.load %arg5[%c0_8, %c0_9] : memref<64x128xf32, #tpu.memory_space<vmem>>, vector<64x128xf32>
    %cst_10 = arith.constant dense<0.000000e+00> : vector<128xf32>
    %15 = vector.multi_reduction <add>, %14, %cst_10 [0] : vector<64x128xf32> to vector<128xf32>
    %16 = vector.shape_cast %15 : vector<128xf32> to vector<1x128xf32>
    %17 = arith.mulf %14, %14 : vector<64x128xf32>
    %cst_11 = arith.constant dense<0.000000e+00> : vector<128xf32>
    %18 = vector.multi_reduction <add>, %17, %cst_11 [0] : vector<64x128xf32> to vector<128xf32>
    %19 = vector.shape_cast %18 : vector<128xf32> to vector<1x128xf32>
    %20 = tpu.concatenate %16, %19 in 0 : vector<1x128xf32>, vector<1x128xf32> -> vector<2x128xf32>
    %c0_12 = arith.constant 0 : index
    %c0_13 = arith.constant 0 : index
    %c0_14 = arith.constant 0 : index
    %c0_15 = arith.constant 0 : index
    %21 = vector.load %arg4[%c0_12, %c0_13, %c0_14, %c0_15] : memref<1x1x2x128xf32, #tpu.memory_space<vmem>>, vector<1x1x2x128xf32>
    %22 = vector.shape_cast %21 : vector<1x1x2x128xf32> to vector<2x128xf32>
    %23 = vector.shape_cast %20 : vector<2x128xf32> to vector<1x1x2x128xf32>
    tpu.vector_store %arg4[%c0_12, %c0_13, %c0_14, %c0_15], %23 {strides = array<i32>} : memref<1x1x2x128xf32, #tpu.memory_space<vmem>>, vector<1x1x2x128xf32>,
    return
  }
  func.func @transform_0(%arg0: i32, %arg1: i32) -> (i32, i32, i32, i32, i32) {
    %c0_i32 = arith.constant 0 : i32
    %c0_i32_0 = arith.constant 0 : i32
    %c0_i32_1 = arith.constant 0 : i32
    %c0_i32_2 = arith.constant 0 : i32
    return %arg0, %arg1, %c0_i32, %c0_i32_0, %c0_i32_1 : i32, i32, i32, i32, i32
  }
  func.func @transform_1(%arg0: i32, %arg1: i32) -> (i32, i32) {
    %c0_i32 = arith.constant 0 : i32
    %c0_i32_0 = arith.constant 0 : i32
    %c0_i32_1 = arith.constant 0 : i32
    return %c0_i32, %c0_i32_0 : i32, i32
  }
  func.func @transform_2(%arg0: i32, %arg1: i32) -> (i32, i32, i32, i32) {
    %c0_i32 = arith.constant 0 : i32
    %c0_i32_0 = arith.constant 0 : i32
    %c0_i32_1 = arith.constant 0 : i32
    return %arg0, %arg1, %c0_i32, %c0_i32_0 : i32, i32, i32, i32
  }
}

module attributes {stable_mosaic.version = 11 : i64} {
  func.func @_conv_bn_relu_kernel(%arg0: i32, %arg1: i32, %arg2: memref<1x1x9x9x16xbf16, #tpu.memory_space<vmem>>, %arg3: memref<64x128xbf16, #tpu.memory_space<vmem>>, %arg4: memref<1x128xf32, #tpu.memory_space<vmem>>, %arg5: memref<1x128xf32, #tpu.memory_space<vmem>>, %arg6: memref<1x1x64x128xf32, #tpu.memory_space<vmem>>, %arg7: memref<64x128xf32, #tpu.memory_space<vmem>>) attributes {dimension_semantics = [#tpu.dimension_semantics<parallel>, #tpu.dimension_semantics<parallel>], iteration_bounds = array<i64: 2, 1>, scalar_prefetch = 0 : i64, scratch_operands = 1 : i64, tpu.core_type = #tpu.core_type<tc>, window_params = [{transform_indices = @transform_0, window_bounds = array<i64: 1, 1, 9, 9, 16>}, {pipeline_mode = #tpu.pipeline_mode<synchronous>, transform_indices = @transform_1, window_bounds = array<i64: 64, 128>}, {pipeline_mode = #tpu.pipeline_mode<synchronous>, transform_indices = @transform_2, window_bounds = array<i64: 1, 128>}, {pipeline_mode = #tpu.pipeline_mode<synchronous>, transform_indices = @transform_3, window_bounds = array<i64: 1, 128>}, {transform_indices = @transform_4, window_bounds = array<i64: 1, 1, 64, 128>}]} {
    %c0 = arith.constant 0 : index
    %c0_0 = arith.constant 0 : index
    %c0_1 = arith.constant 0 : index
    %c0_2 = arith.constant 0 : index
    %c0_3 = arith.constant 0 : index
    %0 = vector.load %arg2[%c0, %c0_0, %c0_1, %c0_2, %c0_3] : memref<1x1x9x9x16xbf16, #tpu.memory_space<vmem>>, vector<1x1x9x9x16xbf16>
    %1 = vector.shape_cast %0 : vector<1x1x9x9x16xbf16> to vector<9x9x16xbf16>
    %2 = vector.extract_strided_slice %1 {offsets = [0, 0, 0], sizes = [8, 8, 16], strides = [1, 1, 1]} : vector<9x9x16xbf16> to vector<8x8x16xbf16>
    %3 = vector.shape_cast %2 : vector<8x8x16xbf16> to vector<64x16xbf16>
    %4 = vector.extract_strided_slice %1 {offsets = [0, 1, 0], sizes = [8, 8, 16], strides = [1, 1, 1]} : vector<9x9x16xbf16> to vector<8x8x16xbf16>
    %5 = vector.shape_cast %4 : vector<8x8x16xbf16> to vector<64x16xbf16>
    %6 = vector.extract_strided_slice %1 {offsets = [1, 0, 0], sizes = [8, 8, 16], strides = [1, 1, 1]} : vector<9x9x16xbf16> to vector<8x8x16xbf16>
    %7 = vector.shape_cast %6 : vector<8x8x16xbf16> to vector<64x16xbf16>
    %8 = vector.extract_strided_slice %1 {offsets = [1, 1, 0], sizes = [8, 8, 16], strides = [1, 1, 1]} : vector<9x9x16xbf16> to vector<8x8x16xbf16>
    %9 = vector.shape_cast %8 : vector<8x8x16xbf16> to vector<64x16xbf16>
    %10 = tpu.concatenate %3, %5, %7, %9 in 1 : vector<64x16xbf16>, vector<64x16xbf16>, vector<64x16xbf16>, vector<64x16xbf16> -> vector<64x64xbf16>
    %c0_4 = arith.constant 0 : index
    %c0_5 = arith.constant 0 : index
    %11 = vector.load %arg3[%c0_4, %c0_5] : memref<64x128xbf16, #tpu.memory_space<vmem>>, vector<64x128xbf16>
    %cst = arith.constant dense<0.000000e+00> : vector<64x128xf32>
    %12 = tpu.matmul %10, %11, %cst {dimension_numbers = #tpu.dot_dimension_numbers<[1], [0], [0], [1], [0, 0, 1, 1], [], []>} : vector<64x64xbf16>, vector<64x128xbf16>, vector<64x128xf32> -> vector<64x128xf32>
    %c0_6 = arith.constant 0 : index
    %c0_7 = arith.constant 0 : index
    %13 = vector.load %arg7[%c0_6, %c0_7] : memref<64x128xf32, #tpu.memory_space<vmem>>, vector<64x128xf32>
    tpu.vector_store %arg7[%c0_6, %c0_7], %12 {strides = array<i32>} : memref<64x128xf32, #tpu.memory_space<vmem>>, vector<64x128xf32>,
    %c0_8 = arith.constant 0 : index
    %c0_9 = arith.constant 0 : index
    %14 = vector.load %arg7[%c0_8, %c0_9] : memref<64x128xf32, #tpu.memory_space<vmem>>, vector<64x128xf32>
    %c0_10 = arith.constant 0 : index
    %c0_11 = arith.constant 0 : index
    %15 = vector.load %arg4[%c0_10, %c0_11] : memref<1x128xf32, #tpu.memory_space<vmem>>, vector<1x128xf32>
    %16 = vector.broadcast %15 : vector<1x128xf32> to vector<64x128xf32>
    %17 = arith.mulf %14, %16 : vector<64x128xf32>
    %c0_12 = arith.constant 0 : index
    %c0_13 = arith.constant 0 : index
    %18 = vector.load %arg5[%c0_12, %c0_13] : memref<1x128xf32, #tpu.memory_space<vmem>>, vector<1x128xf32>
    %19 = vector.broadcast %18 : vector<1x128xf32> to vector<64x128xf32>
    %20 = arith.addf %17, %19 : vector<64x128xf32>
    %cst_14 = arith.constant 0.000000e+00 : f32
    %21 = vector.broadcast %cst_14 : f32 to vector<64x128xf32>
    %22 = arith.maximumf %20, %21 : vector<64x128xf32>
    %c0_15 = arith.constant 0 : index
    %c0_16 = arith.constant 0 : index
    %c0_17 = arith.constant 0 : index
    %c0_18 = arith.constant 0 : index
    %23 = vector.load %arg6[%c0_15, %c0_16, %c0_17, %c0_18] : memref<1x1x64x128xf32, #tpu.memory_space<vmem>>, vector<1x1x64x128xf32>
    %24 = vector.shape_cast %23 : vector<1x1x64x128xf32> to vector<64x128xf32>
    %25 = vector.shape_cast %22 : vector<64x128xf32> to vector<1x1x64x128xf32>
    tpu.vector_store %arg6[%c0_15, %c0_16, %c0_17, %c0_18], %25 {strides = array<i32>} : memref<1x1x64x128xf32, #tpu.memory_space<vmem>>, vector<1x1x64x128xf32>,
    return
  }
  func.func @transform_0(%arg0: i32, %arg1: i32) -> (i32, i32, i32, i32, i32) {
    %c0_i32 = arith.constant 0 : i32
    %c0_i32_0 = arith.constant 0 : i32
    %c0_i32_1 = arith.constant 0 : i32
    %c0_i32_2 = arith.constant 0 : i32
    return %arg0, %arg1, %c0_i32, %c0_i32_0, %c0_i32_1 : i32, i32, i32, i32, i32
  }
  func.func @transform_1(%arg0: i32, %arg1: i32) -> (i32, i32) {
    %c0_i32 = arith.constant 0 : i32
    %c0_i32_0 = arith.constant 0 : i32
    %c0_i32_1 = arith.constant 0 : i32
    return %c0_i32, %c0_i32_0 : i32, i32
  }
  func.func @transform_2(%arg0: i32, %arg1: i32) -> (i32, i32) {
    %c0_i32 = arith.constant 0 : i32
    %c0_i32_0 = arith.constant 0 : i32
    %c0_i32_1 = arith.constant 0 : i32
    return %c0_i32, %c0_i32_0 : i32, i32
  }
  func.func @transform_3(%arg0: i32, %arg1: i32) -> (i32, i32) {
    %c0_i32 = arith.constant 0 : i32
    %c0_i32_0 = arith.constant 0 : i32
    %c0_i32_1 = arith.constant 0 : i32
    return %c0_i32, %c0_i32_0 : i32, i32
  }
  func.func @transform_4(%arg0: i32, %arg1: i32) -> (i32, i32, i32, i32) {
    %c0_i32 = arith.constant 0 : i32
    %c0_i32_0 = arith.constant 0 : i32
    %c0_i32_1 = arith.constant 0 : i32
    return %arg0, %arg1, %c0_i32, %c0_i32_0 : i32, i32, i32, i32
  }
}

</mosaic_0001>

<llo_original>
// kernel: conv_downsample.3
$region0: #{conv_downsample.3}
  #allocation0 [shape = 'u32[]', space=smem, size = 0x4, offset = 0x4, fixed_abs, tag = 'smem constant byte address 0x4 - core index']
  #allocation1 [shape = 'u32[144,128]{1,0:T(1,128)}', space=vmem, size = 0x12000, scoped, tag = 'internal scratch']
  #allocation2 [shape = 'f32[64,128]{1,0:T(8,128)}', space=vmem, size = 0x8000, scoped, tag = 'scratch operand']
  %s0 = inlined_call_operand.vmem [shape: bf16[2,1,9,9,16], index: 0, kind: input, shape index: {}]
  %s1 = inlined_call_operand.vmem [shape: bf16[64,128], index: 1, kind: input, shape index: {}]
  %s2 = inlined_call_operand.vmem [shape: f32[1,128], index: 2, kind: input, shape index: {}]
  %s3 = inlined_call_operand.vmem [shape: f32[1,128], index: 3, kind: input, shape index: {}]
  %s4 = inlined_call_operand.vmem [shape: f32[2,1,64,128], index: 4, kind: output, shape index: {}]
  %s5 = sld [smem:[#allocation0]]
  $region49: #{conv_downsample.3} parent=0
    _
  %s7 = ssub.s32 1, %s5
  %s8 = scalar_select 0, %s7, %s5
  loop: start=0, step=1, limit=4
  $region2: #{conv_downsample.3} parent=0 // loop_pre_header
    _
  $region3: #{conv_downsample.3} parent=0 // loop_header
    %s10 = sphi 0, %s14
    %p11 = scmp.ge.s32.totalorder %s10, 4
    %s17 = sphi 0, %s29
    %s18 = sphi 0, %s25
    %s19 = sphi 0, %s17
    %s20 = sphi 0, %s18
    %s21 = sphi 0, %s19
    %s22 = sphi 0, %s20
    %s34 = sphi 0, %s36
    %s37 = sphi 0, %s34
    %s38 = sphi 0, %s37
    %s54 = sphi 0, %s38
    %s58 = sphi 0, %s58
    %s60 = sphi 0, %s58
    %s61 = sphi 0, %s60
    %s75 = sphi 0, %s61
    %s79 = sphi 0, %s79
    %s81 = sphi 0, %s79
    %s82 = sphi 0, %s81
    %s96 = sphi 0, %s82
    %s100 = sphi 0, %s100
    %s102 = sphi 0, %s100
    %s103 = sphi 0, %s102
    %s117 = sphi 0, %s103
    %s125 = sphi 0, %s127
    %s128 = sphi 0, %s125
    %s129 = sphi 0, %s128
    %s145 = sphi 0, %s129
  $region4: #{conv_downsample.3} parent=0 // loop_header_branch
    %13 = sbr.rel (%p11) target = $region8
  $region5: #{conv_downsample.3} parent=0 // loop_body
    %s15 = ssub.s32 %s10, 1
    %s16 = ssub.s32 %s10, 2
    %s23 = sadd.s32 1, %s18
    %p24 = scmp.ge.s32.totalorder %s23, 1
    %s25 = scalar_select %p24, 0, %s23
    %s26 = sadd.s32 1, %s17
    %s27 = scalar_select %p24, %s26, %s17
    %p28 = scmp.ge.s32.totalorder %s27, 2
    %s29 = scalar_select %p28, 0, %s27
    %s30 = ssub.s32 %s17, %s29
    %s31 = ssub.s32 %s18, %s25
    %s32 = sor.u32 %s30, %s31
    %p33 = scmp.eq.s32.totalorder %s32, 0
    %s35 = sadd.s32 %s34, 1
    %s36 = scalar_select %p33, %s34, %s35
    %p39 = pneg %p33
    %p40 = scmp.eq.s32.totalorder %s10, 1
    %p41 = por %p39, %p40
    %p42 = scmp.ne.s32.totalorder %s34, %s37
    %p43 = scmp.eq.s32.totalorder %s10, 0
    %p44 = por %p42, %p43
    %p45 = scmp.ne.s32.totalorder %s34, %s37
    %p46 = scmp.eq.s32.totalorder %s15, 1
    %p47 = por %p45, %p46
    %p48 = scmp.ne.s32.totalorder %s37, %s38
    %p49 = scmp.eq.s32.totalorder %s15, 0
    %p50 = por %p48, %p49
    %p51 = scmp.ne.s32.totalorder %s37, %s38
    %p52 = scmp.eq.s32.totalorder %s16, 1
    %p53 = por %p51, %p52
    %p55 = scmp.ne.s32.totalorder %s38, %s54
    %p56 = scmp.eq.s32.totalorder %s16, 0
    %p57 = por %p55, %p56
    %s59 = sadd.s32 %s58, 1
    %p62 = scmp.eq.s32.totalorder %s10, 1
    %p63 = scmp.ne.s32.totalorder %s58, %s60
    %p64 = scmp.eq.s32.totalorder %s10, 0
    %p65 = por %p63, %p64
    %p66 = scmp.ne.s32.totalorder %s58, %s60
    %p67 = scmp.eq.s32.totalorder %s15, 1
    %p68 = por %p66, %p67
    %p69 = scmp.ne.s32.totalorder %s60, %s61
    %p70 = scmp.eq.s32.totalorder %s15, 0
    %p71 = por %p69, %p70
    %p72 = scmp.ne.s32.totalorder %s60, %s61
    %p73 = scmp.eq.s32.totalorder %s16, 1
    %p74 = por %p72, %p73
    %p76 = scmp.ne.s32.totalorder %s61, %s75
    %p77 = scmp.eq.s32.totalorder %s16, 0
    %p78 = por %p76, %p77
    %s80 = sadd.s32 %s79, 1
    %p83 = scmp.eq.s32.totalorder %s10, 1
    %p84 = scmp.ne.s32.totalorder %s79, %s81
    %p85 = scmp.eq.s32.totalorder %s10, 0
    %p86 = por %p84, %p85
    %p87 = scmp.ne.s32.totalorder %s79, %s81
    %p88 = scmp.eq.s32.totalorder %s15, 1
    %p89 = por %p87, %p88
    %p90 = scmp.ne.s32.totalorder %s81, %s82
    %p91 = scmp.eq.s32.totalorder %s15, 0
    %p92 = por %p90, %p91
    %p93 = scmp.ne.s32.totalorder %s81, %s82
    %p94 = scmp.eq.s32.totalorder %s16, 1
    %p95 = por %p93, %p94
    %p97 = scmp.ne.s32.totalorder %s82, %s96
    %p98 = scmp.eq.s32.totalorder %s16, 0
    %p99 = por %p97, %p98
    %s101 = sadd.s32 %s100, 1
    %p104 = scmp.eq.s32.totalorder %s10, 1
    %p105 = scmp.ne.s32.totalorder %s100, %s102
    %p106 = scmp.eq.s32.totalorder %s10, 0
    %p107 = por %p105, %p106
    %p108 = scmp.ne.s32.totalorder %s100, %s102
    %p109 = scmp.eq.s32.totalorder %s15, 1
    %p110 = por %p108, %p109
    %p111 = scmp.ne.s32.totalorder %s102, %s103
    %p112 = scmp.eq.s32.totalorder %s15, 0
    %p113 = por %p111, %p112
    %p114 = scmp.ne.s32.totalorder %s102, %s103
    %p115 = scmp.eq.s32.totalorder %s16, 1
    %p116 = por %p114, %p115
    %p118 = scmp.ne.s32.totalorder %s103, %s117
    %p119 = scmp.eq.s32.totalorder %s16, 0
    %p120 = por %p118, %p119
    %s121 = ssub.s32 %s17, %s29
    %s122 = ssub.s32 %s18, %s25
    %s123 = sor.u32 %s121, %s122
    %p124 = scmp.eq.s32.totalorder %s123, 0
    %s126 = sadd.s32 %s125, 1
    %s127 = scalar_select %p124, %s125, %s126
    %p130 = pneg %p124
    %p131 = scmp.eq.s32.totalorder %s10, 1
    %p132 = por %p130, %p131
    %p133 = scmp.ne.s32.totalorder %s125, %s128
    %p134 = scmp.eq.s32.totalorder %s10, 0
    %p135 = por %p133, %p134
    %p136 = scmp.ne.s32.totalorder %s125, %s128
    %p137 = scmp.eq.s32.totalorder %s15, 1
    %p138 = por %p136, %p137
    %p139 = scmp.ne.s32.totalorder %s128, %s129
    %p140 = scmp.eq.s32.totalorder %s15, 0
    %p141 = por %p139, %p140
    %p142 = scmp.ne.s32.totalorder %s128, %s129
    %p143 = scmp.eq.s32.totalorder %s16, 1
    %p144 = por %p142, %p143
    %p146 = scmp.ne.s32.totalorder %s129, %s145
    %p147 = scmp.eq.s32.totalorder %s16, 0
    %p148 = por %p146, %p147
    %p149 = scmp.le.s32.totalorder 1, %s10
    %p150 = scmp.lt.s32.totalorder %s10, 3
    %p151 = pnand %p149, %p150
    %p152 = pneg %p151
    // Predicated region
    $region9: #{conv_downsample.3} parent=5 // pred_check
      _
    $region10: #{conv_downsample.3} parent=5 // pred_check_branch
      %154 = sbr.rel (%p151) target = $region12
    $region11: #{conv_downsample.3} parent=5 // pred_region
      %s155 = ssub.s32 %s10, 1
      // Predicated region
      $region13: #{conv_downsample.3} parent=11 // pred_check
        %p156 = pneg %p71
      $region14: #{conv_downsample.3} parent=11 // pred_check_branch
        %158 = sbr.rel (%p156) target = $region16
      $region15: #{conv_downsample.3} parent=11 // pred_region
        _
      $region16: #{conv_downsample.3} parent=11 // pred_fallthru
        _
      // Predicated region
      $region17: #{conv_downsample.3} parent=11 // pred_check
        %p159 = pneg %p92
      $region18: #{conv_downsample.3} parent=11 // pred_check_branch
        %161 = sbr.rel (%p159) target = $region20
      $region19: #{conv_downsample.3} parent=11 // pred_region
        _
      $region20: #{conv_downsample.3} parent=11 // pred_fallthru
        _
      // Predicated region
      $region21: #{conv_downsample.3} parent=11 // pred_check
        %p162 = pneg %p113
      $region22: #{conv_downsample.3} parent=11 // pred_check_branch
        %164 = sbr.rel (%p162) target = $region24
      $region23: #{conv_downsample.3} parent=11 // pred_region
        _
      $region24: #{conv_downsample.3} parent=11 // pred_fallthru
        _
    $region12: #{conv_downsample.3} parent=5 // pred_fallthru
      _
    %p165 = scmp.lt.s32.totalorder %s10, 2
    // Predicated region
    $region25: #{conv_downsample.3} parent=5 // pred_check
      %p166 = pneg %p165
    $region26: #{conv_downsample.3} parent=5 // pred_check_branch
      %168 = sbr.rel (%p166) target = $region28
    $region27: #{conv_downsample.3} parent=5 // pred_region
      // Predicated region
      $region29: #{conv_downsample.3} parent=27 // pred_check
        %p169 = pneg %p44
      $region30: #{conv_downsample.3} parent=27 // pred_check_branch
        %171 = sbr.rel (%p169) target = $region32
      $region31: #{conv_downsample.3} parent=27 // pred_region
        %p172 = scmp.lt.s32.totalorder %s17, 1
        %s173 = scalar_select %p172, %s17, 1
        %p174 = scmp.lt.s32.totalorder %s18, 0
        %s175 = scalar_select %p174, %s18, 0
        %s176 = smul.addr %s175, 18
        %s177 = smul.addr %s173, 18
        %s178 = sadd.s32 %s176, %s177
        %s179 = smul.addr %s178, 4
        %s180 = scalar_lea.vmem %s0, %s179
      $region32: #{conv_downsample.3} parent=27 // pred_fallthru
        _
    $region28: #{conv_downsample.3} parent=5 // pred_fallthru
      _
    %p181 = scmp.le.s32.totalorder 1, %s10
    %p182 = scmp.lt.s32.totalorder %s10, 3
    %p183 = pnand %p181, %p182
    %p184 = pneg %p183
    // Predicated region
    $region33: #{conv_downsample.3} parent=5 // pred_check
      _
    $region34: #{conv_downsample.3} parent=5 // pred_check_branch
      %186 = sbr.rel (%p183) target = $region36
    $region35: #{conv_downsample.3} parent=5 // pred_region
      %s187 = ssub.s32 %s10, 1
      %p188 = scmp.lt.s32.totalorder %s19, 1
      %s189 = scalar_select %p188, %s19, 1
      %p190 = scmp.lt.s32.totalorder %s20, 0
      %s191 = scalar_select %p190, %s20, 0
      %s192 = smul.addr %s191, 18
      %s193 = smul.addr %s189, 18
      %s194 = sadd.s32 %s192, %s193
      %s195 = smul.addr %s194, 4
      %s196 = scalar_lea.vmem %s0, %s195
      %p197 = pneg %p50
      %p198 = pneg %p47
      %p199 = pneg %p71
      %p200 = pneg %p68
      %p201 = pneg %p92
      %p202 = pneg %p89
      %p203 = pneg %p113
      %p204 = pneg %p110
      %p205 = pneg %p141
      %p206 = pneg %p138
      %p207 = scmp.lt.s32.totalorder %s19, 1
      %s208 = scalar_select %p207, %s19, 1
      %p209 = scmp.lt.s32.totalorder %s20, 0
      %s210 = scalar_select %p209, %s20, 0
      %s211 = smul.addr %s210, 8
      %s212 = smul.addr %s208, 8
      %s213 = sadd.s32 %s211, %s212
      %s214 = smul.addr %s213, 8
      %s215 = scalar_lea.vmem %s4, %s214
      %p216 = scmp.lt.s32.totalorder %s19, 1
      %s217 = scalar_select %p216, %s19, 1
      %p218 = scmp.lt.s32.totalorder %s20, 0
      %s219 = scalar_select %p218, %s20, 0
      %s220 = smul.addr %s219, 18
      %s221 = smul.addr %s217, 18
      %s222 = sadd.s32 %s220, %s221
      %s223 = smul.addr %s222, 4
      %s224 = scalar_lea.vmem %s0, %s223
      %p225 = scmp.lt.s32.totalorder %s19, 1
      %s226 = scalar_select %p225, %s19, 1
      %p227 = scmp.lt.s32.totalorder %s20, 0
      %s228 = scalar_select %p227, %s20, 0
      %s229 = smul.addr %s228, 8
      %s230 = smul.addr %s226, 8
      %s231 = sadd.s32 %s229, %s230
      %s232 = smul.addr %s231, 8
      %s233 = scalar_lea.vmem %s4, %s232
      %v235 = vld [vmem:[%s224] sm:$0xf]
      %v236 = vld [vmem:[%s224 + $0x4] sm:$0x1]
      %v237 = vld [vmem:[%s224 + $0x8] sm:$0xf]
      %v238 = vld [vmem:[%s224 + $0xc] sm:$0x1]
      %v239 = vld [vmem:[%s224 + $0x10] sm:$0xf]
      %v240 = vld [vmem:[%s224 + $0x14] sm:$0x1]
      %v241 = vld [vmem:[%s224 + $0x18] sm:$0xf]
      %v242 = vld [vmem:[%s224 + $0x1c] sm:$0x1]
      %v243 = vld [vmem:[%s224 + $0x20] sm:$0xf]
      %v244 = vld [vmem:[%s224 + $0x24] sm:$0x1]
      %v245 = vld [vmem:[%s224 + $0x28] sm:$0xf]
      %v246 = vld [vmem:[%s224 + $0x2c] sm:$0x1]
      %v247 = vld [vmem:[%s224 + $0x30] sm:$0xf]
      %v248 = vld [vmem:[%s224 + $0x34] sm:$0x1]
      %v249 = vld [vmem:[%s224 + $0x38] sm:$0xf]
      %v250 = vld [vmem:[%s224 + $0x3c] sm:$0x1]
      %v251 = vld [vmem:[%s224 + $0x40] sm:$0xf]
      %v252 = vld [vmem:[%s224 + $0x44] sm:$0x1]
      %vm253 = vsmask.f32 3328
      %vm254 = vsmask.f32 7440
      %vm255 = vmor %vm253, %vm254
      %v257 = vshrl.u32 %v235, 16
      %v259 = vrot.slane %v257, 4
      %v260 = vshll.u32 %v235, 16
      %v262 = vrot.slane %v260, 5
      %v263 = vor.u32 %v259, %v262
      %v264 = vrot.slane %v263, 4
      %v266 = vshll.u32 %v236, 16
      %v268 = vrot.slane %v266, 5
      %v269 = vsel %vm255, %v264, %v268
      %v271 = vshrl.u32 %v237, 16
      %v273 = vrot.slane %v271, 4
      %v274 = vshll.u32 %v237, 16
      %v276 = vrot.slane %v274, 5
      %v277 = vor.u32 %v273, %v276
      %v278 = vrot.slane %v277, 4
      %v280 = vshll.u32 %v238, 16
      %v282 = vrot.slane %v280, 5
      %v283 = vsel %vm255, %v278, %v282
      %v285 = vshrl.u32 %v239, 16
      %v287 = vrot.slane %v285, 4
      %v288 = vshll.u32 %v239, 16
      %v290 = vrot.slane %v288, 5
      %v291 = vor.u32 %v287, %v290
      %v292 = vrot.slane %v291, 4
      %v294 = vshll.u32 %v240, 16
      %v296 = vrot.slane %v294, 5
      %v297 = vsel %vm255, %v292, %v296
      %v299 = vshrl.u32 %v241, 16
      %v301 = vrot.slane %v299, 4
      %v302 = vshll.u32 %v241, 16
      %v304 = vrot.slane %v302, 5
      %v305 = vor.u32 %v301, %v304
      %v306 = vrot.slane %v305, 4
      %v308 = vshll.u32 %v242, 16
      %v310 = vrot.slane %v308, 5
      %v311 = vsel %vm255, %v306, %v310
      %v313 = vshrl.u32 %v243, 16
      %v315 = vrot.slane %v313, 4
      %v316 = vshll.u32 %v243, 16
      %v318 = vrot.slane %v316, 5
      %v319 = vor.u32 %v315, %v318
      %v320 = vrot.slane %v319, 4
      %v322 = vshll.u32 %v244, 16
      %v324 = vrot.slane %v322, 5
      %v325 = vsel %vm255, %v320, %v324
      %v327 = vshrl.u32 %v245, 16
      %v329 = vrot.slane %v327, 4
      %v330 = vshll.u32 %v245, 16
      %v332 = vrot.slane %v330, 5
      %v333 = vor.u32 %v329, %v332
      %v334 = vrot.slane %v333, 4
      %v336 = vshll.u32 %v246, 16
      %v338 = vrot.slane %v336, 5
      %v339 = vsel %vm255, %v334, %v338
      %v341 = vshrl.u32 %v247, 16
      %v343 = vrot.slane %v341, 4
      %v344 = vshll.u32 %v247, 16
      %v346 = vrot.slane %v344, 5
      %v347 = vor.u32 %v343, %v346
      %v348 = vrot.slane %v347, 4
      %v350 = vshll.u32 %v248, 16
      %v352 = vrot.slane %v350, 5
      %v353 = vsel %vm255, %v348, %v352
      %v355 = vshrl.u32 %v249, 16
      %v357 = vrot.slane %v355, 4
      %v358 = vshll.u32 %v249, 16
      %v360 = vrot.slane %v358, 5
      %v361 = vor.u32 %v357, %v360
      %v362 = vrot.slane %v361, 4
      %v364 = vshll.u32 %v250, 16
      %v366 = vrot.slane %v364, 5
      %v367 = vsel %vm255, %v362, %v366
      %v369 = vshrl.u32 %v251, 16
      %v371 = vrot.slane %v369, 4
      %v372 = vshll.u32 %v251, 16
      %v374 = vrot.slane %v372, 5
      %v375 = vor.u32 %v371, %v374
      %v376 = vrot.slane %v375, 4
      %v378 = vshll.u32 %v252, 16
      %v380 = vrot.slane %v378, 5
      %v381 = vsel %vm255, %v376, %v380
      %v390 = vunpack.c.l.b16 %v235
      %v391 = vunpack.c.l.b16 %v237
      %v392 = vunpack.c.l.b16 %v239
      %v393 = vunpack.c.l.b16 %v241
      %v394 = vunpack.c.l.b16 %v243
      %v395 = vunpack.c.l.b16 %v245
      %v396 = vunpack.c.l.b16 %v247
      %v397 = vunpack.c.l.b16 %v249
      %v398 = vpack.c.b16 %v391, %v390
      %v399 = vpack.c.b16 %v393, %v392
      %v400 = vpack.c.b16 %v395, %v394
      %v401 = vpack.c.b16 %v397, %v396
      %v402 = vunpack.c.l.b16 %v269
      %v403 = vunpack.c.l.b16 %v283
      %v404 = vunpack.c.l.b16 %v297
      %v405 = vunpack.c.l.b16 %v311
      %v406 = vunpack.c.l.b16 %v325
      %v407 = vunpack.c.l.b16 %v339
      %v408 = vunpack.c.l.b16 %v353
      %v409 = vunpack.c.l.b16 %v367
      %v410 = vpack.c.b16 %v403, %v402
      %v411 = vpack.c.b16 %v405, %v404
      %v412 = vpack.c.b16 %v407, %v406
      %v413 = vpack.c.b16 %v409, %v408
      %414 = vrot.lane.b32.xlu0 %v410, 16
      %v415 = vpop.permute.xlu0 %414
      %416 = vrot.lane.b32.xlu0 %v411, 16
      %v417 = vpop.permute.xlu0 %416
      %418 = vrot.lane.b32.xlu0 %v412, 16
      %v419 = vpop.permute.xlu0 %418
      %420 = vrot.lane.b32.xlu0 %v413, 16
      %v421 = vpop.permute.xlu0 %420
      %v423 = vunpack.c.l.b16 %v251
      %v424 = vpack.c.b16 %v392, %v391
      %v425 = vpack.c.b16 %v394, %v393
      %v426 = vpack.c.b16 %v396, %v395
      %v427 = vpack.c.b16 %v423, %v397
      %428 = vrot.lane.b32.xlu0 %v424, 32
      %v429 = vpop.permute.xlu0 %428
      %430 = vrot.lane.b32.xlu0 %v425, 32
      %v431 = vpop.permute.xlu0 %430
      %432 = vrot.lane.b32.xlu0 %v426, 32
      %v433 = vpop.permute.xlu0 %432
      %434 = vrot.lane.b32.xlu0 %v427, 32
      %v435 = vpop.permute.xlu0 %434
      %v436 = vunpack.c.l.b16 %v381
      %v437 = vpack.c.b16 %v404, %v403
      %v438 = vpack.c.b16 %v406, %v405
      %v439 = vpack.c.b16 %v408, %v407
      %v440 = vpack.c.b16 %v436, %v409
      %441 = vrot.lane.b32.xlu0 %v437, 48
      %v442 = vpop.permute.xlu0 %441
      %443 = vrot.lane.b32.xlu0 %v438, 48
      %v444 = vpop.permute.xlu0 %443
      %445 = vrot.lane.b32.xlu0 %v439, 48
      %v446 = vpop.permute.xlu0 %445
      %447 = vrot.lane.b32.xlu0 %v440, 48
      %v448 = vpop.permute.xlu0 %447
      %vm449 = vcmask 130048
      %v452 = vsel %vm449, %v398, %v415
      %v455 = vsel %vm449, %v399, %v417
      %v458 = vsel %vm449, %v400, %v419
      %v461 = vsel %vm449, %v401, %v421
      %vm462 = vcmask 261120
      %v464 = vsel %vm462, %v452, %v429
      %v466 = vsel %vm462, %v455, %v431
      %v468 = vsel %vm462, %v458, %v433
      %v470 = vsel %vm462, %v461, %v435
      %vm471 = vcmask 392192
      %v473 = vsel %vm471, %v464, %v442
      %v475 = vsel %vm471, %v466, %v444
      %v477 = vsel %vm471, %v468, %v446
      %v479 = vsel %vm471, %v470, %v448
      %v480 = vld [vmem:[%s1] sm:$0xf]
      %v481 = vld [vmem:[%s1 + $0x4] sm:$0xf]
      %v482 = vld [vmem:[%s1 + $0x8] sm:$0xf]
      %v483 = vld [vmem:[%s1 + $0xc] sm:$0xf]
      %v484 = vld [vmem:[%s1 + $0x10] sm:$0xf]
      %v485 = vld [vmem:[%s1 + $0x14] sm:$0xf]
      %v486 = vld [vmem:[%s1 + $0x18] sm:$0xf]
      %v487 = vld [vmem:[%s1 + $0x1c] sm:$0xf]
      %v496 = vunpack.c.l.b16 %v480
      %v497 = vunpack.c.l.b16 %v481
      %v498 = vunpack.c.l.b16 %v482
      %v499 = vunpack.c.l.b16 %v483
      %v500 = vunpack.c.l.b16 %v484
      %v501 = vunpack.c.l.b16 %v485
      %v502 = vunpack.c.l.b16 %v486
      %v503 = vunpack.c.l.b16 %v487
      %v504 = vpack.c.b16 %v497, %v496
      %v505 = vpack.c.b16 %v499, %v498
      %v506 = vpack.c.b16 %v501, %v500
      %v507 = vpack.c.b16 %v503, %v502
      %vm512 = vcmask 523264
      %v513 = vsel %vm512, %v473, 0
      %v515 = vsel %vm512, %v475, 0
      %v517 = vsel %vm512, %v477, 0
      %v519 = vsel %vm512, %v479, 0
      %521 = vmatprep.subr.bf16.mxu0 0
      %522 = vmatpush1.bf16.msra.mxu0 0
      %523 = vmatprep.subr.bf16.mxu0 0
      %524 = vmatpush1.bf16.msra.mxu0 0
      %525 = vmatprep.subr.bf16.mxu0 0
      %526 = vmatpush1.bf16.msra.mxu0 0
      %527 = vmatprep.subr.bf16.mxu0 0
      %528 = vmatpush1.bf16.msra.mxu0 0
      %529 = vmatprep.subr.bf16.mxu0 0
      %530 = vmatpush1.bf16.msra.mxu0 %v507
      %531 = vmatprep.subr.bf16.mxu0 0
      %532 = vmatpush1.bf16.msra.mxu0 %v506
      %533 = vmatprep.subr.bf16.mxu0 0
      %534 = vmatpush1.bf16.msra.mxu0 %v505
      %535 = vmatprep.subr.bf16.mxu0 0
      %536 = vmatpush1.bf16.msra.mxu0 %v504
      %537 = vmatprep.subr.bf16.mxu0 0
      %538 = vmatpush2.bf16.msra.mxu0 0
      %539 = vmatprep.subr.bf16.mxu0 0
      %540 = vmatpush2.bf16.msra.mxu0 0
      %541 = vmatprep.subr.bf16.mxu0 0
      %542 = vmatpush2.bf16.msra.mxu0 0
      %543 = vmatprep.subr.bf16.mxu0 0
      %544 = vmatpush2.bf16.msra.mxu0 0
      %545 = vmatprep.subr.bf16.mxu0 0
      %546 = vmatpush2.bf16.msra.mxu0 0
      %547 = vmatprep.subr.bf16.mxu0 0
      %548 = vmatpush2.bf16.msra.mxu0 0
      %549 = vmatprep.subr.bf16.mxu0 0
      %550 = vmatpush2.bf16.msra.mxu0 0
      %551 = vmatprep.subr.bf16.mxu0 0
      %552 = vmatpush2.bf16.msra.mxu0 0
      %553 = vmatprep.mubr.bf16.mxu0 0
      %554 = vmatmul.mubr.bf16.gmra.mxu0 %v513
      %v555 = vpop.f32.mrf.mxu0
      %v556 = vadd.f32 0.0, %v555
      %v557 = vpop.f32.mrf.mxu0
      %v558 = vpop.f32.mrf.mxu0
      %v559 = vadd.f32 0.0, %v558
      %v560 = vpop.f32.mrf.mxu0
      %561 = vmatprep.mubr.bf16.mxu0 0
      %562 = vmatmul.mubr.bf16.gmra.mxu0 %v515
      %v563 = vpop.f32.mrf.mxu0
      %v564 = vadd.f32 0.0, %v563
      %v565 = vpop.f32.mrf.mxu0
      %v566 = vpop.f32.mrf.mxu0
      %v567 = vadd.f32 0.0, %v566
      %v568 = vpop.f32.mrf.mxu0
      %569 = vmatprep.mubr.bf16.mxu0 0
      %570 = vmatmul.mubr.bf16.gmra.mxu0 %v517
      %v571 = vpop.f32.mrf.mxu0
      %v572 = vadd.f32 0.0, %v571
      %v573 = vpop.f32.mrf.mxu0
      %v574 = vpop.f32.mrf.mxu0
      %v575 = vadd.f32 0.0, %v574
      %v576 = vpop.f32.mrf.mxu0
      %577 = vmatprep.mubr.bf16.mxu0 0
      %578 = vmatmul.mubr.bf16.gmra.mxu0 %v519
      %v579 = vpop.f32.mrf.mxu0
      %v580 = vadd.f32 0.0, %v579
      %v581 = vpop.f32.mrf.mxu0
      %v582 = vpop.f32.mrf.mxu0
      %v583 = vadd.f32 0.0, %v582
      %v584 = vpop.f32.mrf.mxu0
      %585 = vdwg.mxu0
      %586 = vst [vmem:[#allocation2] sm:$0xff] %v556
      %587 = vst [vmem:[#allocation2 + $0x8] sm:$0xff] %v559
      %588 = vst [vmem:[#allocation2 + $0x10] sm:$0xff] %v564
      %589 = vst [vmem:[#allocation2 + $0x18] sm:$0xff] %v567
      %590 = vst [vmem:[#allocation2 + $0x20] sm:$0xff] %v572
      %591 = vst [vmem:[#allocation2 + $0x28] sm:$0xff] %v575
      %592 = vst [vmem:[#allocation2 + $0x30] sm:$0xff] %v580
      %593 = vst [vmem:[#allocation2 + $0x38] sm:$0xff] %v583
      %v594 = vld [vmem:[#allocation2] sm:$0xff]
      %v595 = vld [vmem:[#allocation2 + $0x8] sm:$0xff]
      %v596 = vld [vmem:[#allocation2 + $0x10] sm:$0xff]
      %v597 = vld [vmem:[#allocation2 + $0x18] sm:$0xff]
      %v598 = vld [vmem:[#allocation2 + $0x20] sm:$0xff]
      %v599 = vld [vmem:[#allocation2 + $0x28] sm:$0xff]
      %v600 = vld [vmem:[#allocation2 + $0x30] sm:$0xff]
      %v601 = vld [vmem:[#allocation2 + $0x38] sm:$0xff]
      %v602 = vld [vmem:[%s2] sm:$0x1]
      %v604 = vlaneseq
      %v605 = vshrl.u32 %v604, 7
      %v606 = vsub.s32 0, %v605
      %v607 = vrot.slane %v602, %v606
      %v609 = vmul.f32 %v594, %v607
      %v610 = vmul.f32 %v595, %v607
      %v611 = vmul.f32 %v596, %v607
      %v612 = vmul.f32 %v597, %v607
      %v613 = vmul.f32 %v598, %v607
      %v614 = vmul.f32 %v599, %v607
      %v615 = vmul.f32 %v600, %v607
      %v616 = vmul.f32 %v601, %v607
      %v617 = vld [vmem:[%s3] sm:$0x1]
      %v619 = vlaneseq
      %v620 = vshrl.u32 %v619, 7
      %v621 = vsub.s32 0, %v620
      %v622 = vrot.slane %v617, %v621
      %v624 = vadd.f32 %v609, %v622
      %v625 = vadd.f32 %v610, %v622
      %v626 = vadd.f32 %v611, %v622
      %v627 = vadd.f32 %v612, %v622
      %v628 = vadd.f32 %v613, %v622
      %v629 = vadd.f32 %v614, %v622
      %v630 = vadd.f32 %v615, %v622
      %v631 = vadd.f32 %v616, %v622
      %v632 = vmax.f32 %v624, 0.0
      %v633 = vmax.f32 %v625, 0.0
      %v634 = vmax.f32 %v626, 0.0
      %v635 = vmax.f32 %v627, 0.0
      %v636 = vmax.f32 %v628, 0.0
      %v637 = vmax.f32 %v629, 0.0
      %v638 = vmax.f32 %v630, 0.0
      %v639 = vmax.f32 %v631, 0.0
      %640 = vst [vmem:[%s233] sm:$0xff] %v632
      %641 = vst [vmem:[%s233 + $0x8] sm:$0xff] %v633
      %642 = vst [vmem:[%s233 + $0x10] sm:$0xff] %v634
      %643 = vst [vmem:[%s233 + $0x18] sm:$0xff] %v635
      %644 = vst [vmem:[%s233 + $0x20] sm:$0xff] %v636
      %645 = vst [vmem:[%s233 + $0x28] sm:$0xff] %v637
      %646 = vst [vmem:[%s233 + $0x30] sm:$0xff] %v638
      %647 = vst [vmem:[%s233 + $0x38] sm:$0xff] %v639
      %p648 = scmp.lt.s32.totalorder %s19, 1
      %s649 = scalar_select %p648, %s19, 1
      %p650 = scmp.lt.s32.totalorder %s20, 0
      %s651 = scalar_select %p650, %s20, 0
      %s652 = smul.addr %s651, 8
      %s653 = smul.addr %s649, 8
      %s654 = sadd.s32 %s652, %s653
      %s655 = smul.addr %s654, 8
      %s656 = scalar_lea.vmem %s4, %s655
      // Predicated region
      $region37: #{conv_downsample.3} parent=35 // pred_check
        %p657 = pneg %p138
      $region38: #{conv_downsample.3} parent=35 // pred_check_branch
        %659 = sbr.rel (%p657) target = $region40
      $region39: #{conv_downsample.3} parent=35 // pred_region
        _
      $region40: #{conv_downsample.3} parent=35 // pred_fallthru
        _
    $region36: #{conv_downsample.3} parent=5 // pred_fallthru
      _
    %p660 = scmp.le.s32.totalorder 2, %s10
    // Predicated region
    $region41: #{conv_downsample.3} parent=5 // pred_check
      %p661 = pneg %p660
    $region42: #{conv_downsample.3} parent=5 // pred_check_branch
      %663 = sbr.rel (%p661) target = $region44
    $region43: #{conv_downsample.3} parent=5 // pred_region
      %s664 = ssub.s32 %s10, 2
      // Predicated region
      $region45: #{conv_downsample.3} parent=43 // pred_check
        %p665 = pneg %p144
      $region46: #{conv_downsample.3} parent=43 // pred_check_branch
        %667 = sbr.rel (%p665) target = $region48
      $region47: #{conv_downsample.3} parent=43 // pred_region
        %p668 = scmp.lt.s32.totalorder %s21, 1
        %s669 = scalar_select %p668, %s21, 1
        %p670 = scmp.lt.s32.totalorder %s22, 0
        %s671 = scalar_select %p670, %s22, 0
        %s672 = smul.addr %s671, 8
        %s673 = smul.addr %s669, 8
        %s674 = sadd.s32 %s672, %s673
        %s675 = smul.addr %s674, 8
        %s676 = scalar_lea.vmem %s4, %s675
      $region48: #{conv_downsample.3} parent=43 // pred_fallthru
        _
    $region44: #{conv_downsample.3} parent=5 // pred_fallthru
      _
  $region6: #{conv_downsample.3} parent=0 // loop_footer
    %s14 = sadd.s32 1, %s10
  $region7: #{conv_downsample.3} parent=0 // loop_footer_branch
    %9 = sbr.rel target = $region3
  $region8: #{conv_downsample.3} parent=0 // loop_exit
    _

// kernel: conv_downsample.2
$region0: #{conv_downsample.2}
  #allocation0 [shape = 'u32[]', space=smem, size = 0x4, offset = 0x4, fixed_abs, tag = 'smem constant byte address 0x4 - core index']
  #allocation1 [shape = 'u32[144,128]{1,0:T(1,128)}', space=vmem, size = 0x12000, scoped, tag = 'internal scratch']
  #allocation2 [shape = 'f32[64,128]{1,0:T(8,128)}', space=vmem, size = 0x8000, scoped, tag = 'scratch operand']
  %s0 = inlined_call_operand.vmem [shape: bf16[2,1,9,9,16], index: 0, kind: input, shape index: {}]
  %s1 = inlined_call_operand.vmem [shape: bf16[64,128], index: 1, kind: input, shape index: {}]
  %s2 = inlined_call_operand.vmem [shape: f32[2,1,2,128], index: 2, kind: output, shape index: {}]
  %s3 = sld [smem:[#allocation0]]
  $region41: #{conv_downsample.2} parent=0
    _
  %s5 = ssub.s32 1, %s3
  %s6 = scalar_select 0, %s5, %s3
  loop: start=0, step=1, limit=4
  $region2: #{conv_downsample.2} parent=0 // loop_pre_header
    _
  $region3: #{conv_downsample.2} parent=0 // loop_header
    %s8 = sphi 0, %s12
    %p9 = scmp.ge.s32.totalorder %s8, 4
    %s15 = sphi 0, %s27
    %s16 = sphi 0, %s23
    %s17 = sphi 0, %s15
    %s18 = sphi 0, %s16
    %s19 = sphi 0, %s17
    %s20 = sphi 0, %s18
    %s32 = sphi 0, %s34
    %s35 = sphi 0, %s32
    %s36 = sphi 0, %s35
    %s52 = sphi 0, %s36
    %s56 = sphi 0, %s56
    %s58 = sphi 0, %s56
    %s59 = sphi 0, %s58
    %s73 = sphi 0, %s59
    %s81 = sphi 0, %s83
    %s84 = sphi 0, %s81
    %s85 = sphi 0, %s84
    %s101 = sphi 0, %s85
  $region4: #{conv_downsample.2} parent=0 // loop_header_branch
    %11 = sbr.rel (%p9) target = $region8
  $region5: #{conv_downsample.2} parent=0 // loop_body
    %s13 = ssub.s32 %s8, 1
    %s14 = ssub.s32 %s8, 2
    %s21 = sadd.s32 1, %s16
    %p22 = scmp.ge.s32.totalorder %s21, 1
    %s23 = scalar_select %p22, 0, %s21
    %s24 = sadd.s32 1, %s15
    %s25 = scalar_select %p22, %s24, %s15
    %p26 = scmp.ge.s32.totalorder %s25, 2
    %s27 = scalar_select %p26, 0, %s25
    %s28 = ssub.s32 %s15, %s27
    %s29 = ssub.s32 %s16, %s23
    %s30 = sor.u32 %s28, %s29
    %p31 = scmp.eq.s32.totalorder %s30, 0
    %s33 = sadd.s32 %s32, 1
    %s34 = scalar_select %p31, %s32, %s33
    %p37 = pneg %p31
    %p38 = scmp.eq.s32.totalorder %s8, 1
    %p39 = por %p37, %p38
    %p40 = scmp.ne.s32.totalorder %s32, %s35
    %p41 = scmp.eq.s32.totalorder %s8, 0
    %p42 = por %p40, %p41
    %p43 = scmp.ne.s32.totalorder %s32, %s35
    %p44 = scmp.eq.s32.totalorder %s13, 1
    %p45 = por %p43, %p44
    %p46 = scmp.ne.s32.totalorder %s35, %s36
    %p47 = scmp.eq.s32.totalorder %s13, 0
    %p48 = por %p46, %p47
    %p49 = scmp.ne.s32.totalorder %s35, %s36
    %p50 = scmp.eq.s32.totalorder %s14, 1
    %p51 = por %p49, %p50
    %p53 = scmp.ne.s32.totalorder %s36, %s52
    %p54 = scmp.eq.s32.totalorder %s14, 0
    %p55 = por %p53, %p54
    %s57 = sadd.s32 %s56, 1
    %p60 = scmp.eq.s32.totalorder %s8, 1
    %p61 = scmp.ne.s32.totalorder %s56, %s58
    %p62 = scmp.eq.s32.totalorder %s8, 0
    %p63 = por %p61, %p62
    %p64 = scmp.ne.s32.totalorder %s56, %s58
    %p65 = scmp.eq.s32.totalorder %s13, 1
    %p66 = por %p64, %p65
    %p67 = scmp.ne.s32.totalorder %s58, %s59
    %p68 = scmp.eq.s32.totalorder %s13, 0
    %p69 = por %p67, %p68
    %p70 = scmp.ne.s32.totalorder %s58, %s59
    %p71 = scmp.eq.s32.totalorder %s14, 1
    %p72 = por %p70, %p71
    %p74 = scmp.ne.s32.totalorder %s59, %s73
    %p75 = scmp.eq.s32.totalorder %s14, 0
    %p76 = por %p74, %p75
    %s77 = ssub.s32 %s15, %s27
    %s78 = ssub.s32 %s16, %s23
    %s79 = sor.u32 %s77, %s78
    %p80 = scmp.eq.s32.totalorder %s79, 0
    %s82 = sadd.s32 %s81, 1
    %s83 = scalar_select %p80, %s81, %s82
    %p86 = pneg %p80
    %p87 = scmp.eq.s32.totalorder %s8, 1
    %p88 = por %p86, %p87
    %p89 = scmp.ne.s32.totalorder %s81, %s84
    %p90 = scmp.eq.s32.totalorder %s8, 0
    %p91 = por %p89, %p90
    %p92 = scmp.ne.s32.totalorder %s81, %s84
    %p93 = scmp.eq.s32.totalorder %s13, 1
    %p94 = por %p92, %p93
    %p95 = scmp.ne.s32.totalorder %s84, %s85
    %p96 = scmp.eq.s32.totalorder %s13, 0
    %p97 = por %p95, %p96
    %p98 = scmp.ne.s32.totalorder %s84, %s85
    %p99 = scmp.eq.s32.totalorder %s14, 1
    %p100 = por %p98, %p99
    %p102 = scmp.ne.s32.totalorder %s85, %s101
    %p103 = scmp.eq.s32.totalorder %s14, 0
    %p104 = por %p102, %p103
    %p105 = scmp.le.s32.totalorder 1, %s8
    %p106 = scmp.lt.s32.totalorder %s8, 3
    %p107 = pnand %p105, %p106
    %p108 = pneg %p107
    // Predicated region
    $region9: #{conv_downsample.2} parent=5 // pred_check
      _
    $region10: #{conv_downsample.2} parent=5 // pred_check_branch
      %110 = sbr.rel (%p107) target = $region12
    $region11: #{conv_downsample.2} parent=5 // pred_region
      %s111 = ssub.s32 %s8, 1
      // Predicated region
      $region13: #{conv_downsample.2} parent=11 // pred_check
        %p112 = pneg %p69
      $region14: #{conv_downsample.2} parent=11 // pred_check_branch
        %114 = sbr.rel (%p112) target = $region16
      $region15: #{conv_downsample.2} parent=11 // pred_region
        _
      $region16: #{conv_downsample.2} parent=11 // pred_fallthru
        _
    $region12: #{conv_downsample.2} parent=5 // pred_fallthru
      _
    %p115 = scmp.lt.s32.totalorder %s8, 2
    // Predicated region
    $region17: #{conv_downsample.2} parent=5 // pred_check
      %p116 = pneg %p115
    $region18: #{conv_downsample.2} parent=5 // pred_check_branch
      %118 = sbr.rel (%p116) target = $region20
    $region19: #{conv_downsample.2} parent=5 // pred_region
      // Predicated region
      $region21: #{conv_downsample.2} parent=19 // pred_check
        %p119 = pneg %p42
      $region22: #{conv_downsample.2} parent=19 // pred_check_branch
        %121 = sbr.rel (%p119) target = $region24
      $region23: #{conv_downsample.2} parent=19 // pred_region
        %p122 = scmp.lt.s32.totalorder %s15, 1
        %s123 = scalar_select %p122, %s15, 1
        %p124 = scmp.lt.s32.totalorder %s16, 0
        %s125 = scalar_select %p124, %s16, 0
        %s126 = smul.addr %s125, 18
        %s127 = smul.addr %s123, 18
        %s128 = sadd.s32 %s126, %s127
        %s129 = smul.addr %s128, 4
        %s130 = scalar_lea.vmem %s0, %s129
      $region24: #{conv_downsample.2} parent=19 // pred_fallthru
        _
    $region20: #{conv_downsample.2} parent=5 // pred_fallthru
      _
    %p131 = scmp.le.s32.totalorder 1, %s8
    %p132 = scmp.lt.s32.totalorder %s8, 3
    %p133 = pnand %p131, %p132
    %p134 = pneg %p133
    // Predicated region
    $region25: #{conv_downsample.2} parent=5 // pred_check
      _
    $region26: #{conv_downsample.2} parent=5 // pred_check_branch
      %136 = sbr.rel (%p133) target = $region28
    $region27: #{conv_downsample.2} parent=5 // pred_region
      %s137 = ssub.s32 %s8, 1
      %p138 = scmp.lt.s32.totalorder %s17, 1
      %s139 = scalar_select %p138, %s17, 1
      %p140 = scmp.lt.s32.totalorder %s18, 0
      %s141 = scalar_select %p140, %s18, 0
      %s142 = smul.addr %s141, 18
      %s143 = smul.addr %s139, 18
      %s144 = sadd.s32 %s142, %s143
      %s145 = smul.addr %s144, 4
      %s146 = scalar_lea.vmem %s0, %s145
      %p147 = pneg %p48
      %p148 = pneg %p45
      %p149 = pneg %p69
      %p150 = pneg %p66
      %p151 = pneg %p97
      %p152 = pneg %p94
      %p153 = scmp.lt.s32.totalorder %s17, 1
      %s154 = scalar_select %p153, %s17, 1
      %p155 = scmp.lt.s32.totalorder %s18, 0
      %s156 = scalar_select %p155, %s18, 0
      %s157 = sadd.s32 %s156, %s154
      %s158 = smul.addr %s157, 2
      %s159 = scalar_lea.vmem %s2, %s158
      %p160 = scmp.lt.s32.totalorder %s17, 1
      %s161 = scalar_select %p160, %s17, 1
      %p162 = scmp.lt.s32.totalorder %s18, 0
      %s163 = scalar_select %p162, %s18, 0
      %s164 = smul.addr %s163, 18
      %s165 = smul.addr %s161, 18
      %s166 = sadd.s32 %s164, %s165
      %s167 = smul.addr %s166, 4
      %s168 = scalar_lea.vmem %s0, %s167
      %p169 = scmp.lt.s32.totalorder %s17, 1
      %s170 = scalar_select %p169, %s17, 1
      %p171 = scmp.lt.s32.totalorder %s18, 0
      %s172 = scalar_select %p171, %s18, 0
      %s173 = sadd.s32 %s172, %s170
      %s174 = smul.addr %s173, 2
      %s175 = scalar_lea.vmem %s2, %s174
      %v177 = vld [vmem:[%s168] sm:$0xf]
      %v178 = vld [vmem:[%s168 + $0x4] sm:$0x1]
      %v179 = vld [vmem:[%s168 + $0x8] sm:$0xf]
      %v180 = vld [vmem:[%s168 + $0xc] sm:$0x1]
      %v181 = vld [vmem:[%s168 + $0x10] sm:$0xf]
      %v182 = vld [vmem:[%s168 + $0x14] sm:$0x1]
      %v183 = vld [vmem:[%s168 + $0x18] sm:$0xf]
      %v184 = vld [vmem:[%s168 + $0x1c] sm:$0x1]
      %v185 = vld [vmem:[%s168 + $0x20] sm:$0xf]
      %v186 = vld [vmem:[%s168 + $0x24] sm:$0x1]
      %v187 = vld [vmem:[%s168 + $0x28] sm:$0xf]
      %v188 = vld [vmem:[%s168 + $0x2c] sm:$0x1]
      %v189 = vld [vmem:[%s168 + $0x30] sm:$0xf]
      %v190 = vld [vmem:[%s168 + $0x34] sm:$0x1]
      %v191 = vld [vmem:[%s168 + $0x38] sm:$0xf]
      %v192 = vld [vmem:[%s168 + $0x3c] sm:$0x1]
      %v193 = vld [vmem:[%s168 + $0x40] sm:$0xf]
      %v194 = vld [vmem:[%s168 + $0x44] sm:$0x1]
      %vm195 = vsmask.f32 3328
      %vm196 = vsmask.f32 7440
      %vm197 = vmor %vm195, %vm196
      %v199 = vshrl.u32 %v177, 16
      %v201 = vrot.slane %v199, 4
      %v202 = vshll.u32 %v177, 16
      %v204 = vrot.slane %v202, 5
      %v205 = vor.u32 %v201, %v204
      %v206 = vrot.slane %v205, 4
      %v208 = vshll.u32 %v178, 16
      %v210 = vrot.slane %v208, 5
      %v211 = vsel %vm197, %v206, %v210
      %v213 = vshrl.u32 %v179, 16
      %v215 = vrot.slane %v213, 4
      %v216 = vshll.u32 %v179, 16
      %v218 = vrot.slane %v216, 5
      %v219 = vor.u32 %v215, %v218
      %v220 = vrot.slane %v219, 4
      %v222 = vshll.u32 %v180, 16
      %v224 = vrot.slane %v222, 5
      %v225 = vsel %vm197, %v220, %v224
      %v227 = vshrl.u32 %v181, 16
      %v229 = vrot.slane %v227, 4
      %v230 = vshll.u32 %v181, 16
      %v232 = vrot.slane %v230, 5
      %v233 = vor.u32 %v229, %v232
      %v234 = vrot.slane %v233, 4
      %v236 = vshll.u32 %v182, 16
      %v238 = vrot.slane %v236, 5
      %v239 = vsel %vm197, %v234, %v238
      %v241 = vshrl.u32 %v183, 16
      %v243 = vrot.slane %v241, 4
      %v244 = vshll.u32 %v183, 16
      %v246 = vrot.slane %v244, 5
      %v247 = vor.u32 %v243, %v246
      %v248 = vrot.slane %v247, 4
      %v250 = vshll.u32 %v184, 16
      %v252 = vrot.slane %v250, 5
      %v253 = vsel %vm197, %v248, %v252
      %v255 = vshrl.u32 %v185, 16
      %v257 = vrot.slane %v255, 4
      %v258 = vshll.u32 %v185, 16
      %v260 = vrot.slane %v258, 5
      %v261 = vor.u32 %v257, %v260
      %v262 = vrot.slane %v261, 4
      %v264 = vshll.u32 %v186, 16
      %v266 = vrot.slane %v264, 5
      %v267 = vsel %vm197, %v262, %v266
      %v269 = vshrl.u32 %v187, 16
      %v271 = vrot.slane %v269, 4
      %v272 = vshll.u32 %v187, 16
      %v274 = vrot.slane %v272, 5
      %v275 = vor.u32 %v271, %v274
      %v276 = vrot.slane %v275, 4
      %v278 = vshll.u32 %v188, 16
      %v280 = vrot.slane %v278, 5
      %v281 = vsel %vm197, %v276, %v280
      %v283 = vshrl.u32 %v189, 16
      %v285 = vrot.slane %v283, 4
      %v286 = vshll.u32 %v189, 16
      %v288 = vrot.slane %v286, 5
      %v289 = vor.u32 %v285, %v288
      %v290 = vrot.slane %v289, 4
      %v292 = vshll.u32 %v190, 16
      %v294 = vrot.slane %v292, 5
      %v295 = vsel %vm197, %v290, %v294
      %v297 = vshrl.u32 %v191, 16
      %v299 = vrot.slane %v297, 4
      %v300 = vshll.u32 %v191, 16
      %v302 = vrot.slane %v300, 5
      %v303 = vor.u32 %v299, %v302
      %v304 = vrot.slane %v303, 4
      %v306 = vshll.u32 %v192, 16
      %v308 = vrot.slane %v306, 5
      %v309 = vsel %vm197, %v304, %v308
      %v311 = vshrl.u32 %v193, 16
      %v313 = vrot.slane %v311, 4
      %v314 = vshll.u32 %v193, 16
      %v316 = vrot.slane %v314, 5
      %v317 = vor.u32 %v313, %v316
      %v318 = vrot.slane %v317, 4
      %v320 = vshll.u32 %v194, 16
      %v322 = vrot.slane %v320, 5
      %v323 = vsel %vm197, %v318, %v322
      %v332 = vunpack.c.l.b16 %v177
      %v333 = vunpack.c.l.b16 %v179
      %v334 = vunpack.c.l.b16 %v181
      %v335 = vunpack.c.l.b16 %v183
      %v336 = vunpack.c.l.b16 %v185
      %v337 = vunpack.c.l.b16 %v187
      %v338 = vunpack.c.l.b16 %v189
      %v339 = vunpack.c.l.b16 %v191
      %v340 = vpack.c.b16 %v333, %v332
      %v341 = vpack.c.b16 %v335, %v334
      %v342 = vpack.c.b16 %v337, %v336
      %v343 = vpack.c.b16 %v339, %v338
      %v344 = vunpack.c.l.b16 %v211
      %v345 = vunpack.c.l.b16 %v225
      %v346 = vunpack.c.l.b16 %v239
      %v347 = vunpack.c.l.b16 %v253
      %v348 = vunpack.c.l.b16 %v267
      %v349 = vunpack.c.l.b16 %v281
      %v350 = vunpack.c.l.b16 %v295
      %v351 = vunpack.c.l.b16 %v309
      %v352 = vpack.c.b16 %v345, %v344
      %v353 = vpack.c.b16 %v347, %v346
      %v354 = vpack.c.b16 %v349, %v348
      %v355 = vpack.c.b16 %v351, %v350
      %356 = vrot.lane.b32.xlu0 %v352, 16
      %v357 = vpop.permute.xlu0 %356
      %358 = vrot.lane.b32.xlu0 %v353, 16
      %v359 = vpop.permute.xlu0 %358
      %360 = vrot.lane.b32.xlu0 %v354, 16
      %v361 = vpop.permute.xlu0 %360
      %362 = vrot.lane.b32.xlu0 %v355, 16
      %v363 = vpop.permute.xlu0 %362
      %v365 = vunpack.c.l.b16 %v193
      %v366 = vpack.c.b16 %v334, %v333
      %v367 = vpack.c.b16 %v336, %v335
      %v368 = vpack.c.b16 %v338, %v337
      %v369 = vpack.c.b16 %v365, %v339
      %370 = vrot.lane.b32.xlu0 %v366, 32
      %v371 = vpop.permute.xlu0 %370
      %372 = vrot.lane.b32.xlu0 %v367, 32
      %v373 = vpop.permute.xlu0 %372
      %374 = vrot.lane.b32.xlu0 %v368, 32
      %v375 = vpop.permute.xlu0 %374
      %376 = vrot.lane.b32.xlu0 %v369, 32
      %v377 = vpop.permute.xlu0 %376
      %v378 = vunpack.c.l.b16 %v323
      %v379 = vpack.c.b16 %v346, %v345
      %v380 = vpack.c.b16 %v348, %v347
      %v381 = vpack.c.b16 %v350, %v349
      %v382 = vpack.c.b16 %v378, %v351
      %383 = vrot.lane.b32.xlu0 %v379, 48
      %v384 = vpop.permute.xlu0 %383
      %385 = vrot.lane.b32.xlu0 %v380, 48
      %v386 = vpop.permute.xlu0 %385
      %387 = vrot.lane.b32.xlu0 %v381, 48
      %v388 = vpop.permute.xlu0 %387
      %389 = vrot.lane.b32.xlu0 %v382, 48
      %v390 = vpop.permute.xlu0 %389
      %vm391 = vcmask 130048
      %v394 = vsel %vm391, %v340, %v357
      %v397 = vsel %vm391, %v341, %v359
      %v400 = vsel %vm391, %v342, %v361
      %v403 = vsel %vm391, %v343, %v363
      %vm404 = vcmask 261120
      %v406 = vsel %vm404, %v394, %v371
      %v408 = vsel %vm404, %v397, %v373
      %v410 = vsel %vm404, %v400, %v375
      %v412 = vsel %vm404, %v403, %v377
      %vm413 = vcmask 392192
      %v415 = vsel %vm413, %v406, %v384
      %v417 = vsel %vm413, %v408, %v386
      %v419 = vsel %vm413, %v410, %v388
      %v421 = vsel %vm413, %v412, %v390
      %v422 = vld [vmem:[%s1] sm:$0xf]
      %v423 = vld [vmem:[%s1 + $0x4] sm:$0xf]
      %v424 = vld [vmem:[%s1 + $0x8] sm:$0xf]
      %v425 = vld [vmem:[%s1 + $0xc] sm:$0xf]
      %v426 = vld [vmem:[%s1 + $0x10] sm:$0xf]
      %v427 = vld [vmem:[%s1 + $0x14] sm:$0xf]
      %v428 = vld [vmem:[%s1 + $0x18] sm:$0xf]
      %v429 = vld [vmem:[%s1 + $0x1c] sm:$0xf]
      %v438 = vunpack.c.l.b16 %v422
      %v439 = vunpack.c.l.b16 %v423
      %v440 = vunpack.c.l.b16 %v424
      %v441 = vunpack.c.l.b16 %v425
      %v442 = vunpack.c.l.b16 %v426
      %v443 = vunpack.c.l.b16 %v427
      %v444 = vunpack.c.l.b16 %v428
      %v445 = vunpack.c.l.b16 %v429
      %v446 = vpack.c.b16 %v439, %v438
      %v447 = vpack.c.b16 %v441, %v440
      %v448 = vpack.c.b16 %v443, %v442
      %v449 = vpack.c.b16 %v445, %v444
      %vm454 = vcmask 523264
      %v455 = vsel %vm454, %v415, 0
      %v457 = vsel %vm454, %v417, 0
      %v459 = vsel %vm454, %v419, 0
      %v461 = vsel %vm454, %v421, 0
      %463 = vmatprep.subr.bf16.mxu0 0
      %464 = vmatpush1.bf16.msra.mxu0 0
      %465 = vmatprep.subr.bf16.mxu0 0
      %466 = vmatpush1.bf16.msra.mxu0 0
      %467 = vmatprep.subr.bf16.mxu0 0
      %468 = vmatpush1.bf16.msra.mxu0 0
      %469 = vmatprep.subr.bf16.mxu0 0
      %470 = vmatpush1.bf16.msra.mxu0 0
      %471 = vmatprep.subr.bf16.mxu0 0
      %472 = vmatpush1.bf16.msra.mxu0 %v449
      %473 = vmatprep.subr.bf16.mxu0 0
      %474 = vmatpush1.bf16.msra.mxu0 %v448
      %475 = vmatprep.subr.bf16.mxu0 0
      %476 = vmatpush1.bf16.msra.mxu0 %v447
      %477 = vmatprep.subr.bf16.mxu0 0
      %478 = vmatpush1.bf16.msra.mxu0 %v446
      %479 = vmatprep.subr.bf16.mxu0 0
      %480 = vmatpush2.bf16.msra.mxu0 0
      %481 = vmatprep.subr.bf16.mxu0 0
      %482 = vmatpush2.bf16.msra.mxu0 0
      %483 = vmatprep.subr.bf16.mxu0 0
      %484 = vmatpush2.bf16.msra.mxu0 0
      %485 = vmatprep.subr.bf16.mxu0 0
      %486 = vmatpush2.bf16.msra.mxu0 0
      %487 = vmatprep.subr.bf16.mxu0 0
      %488 = vmatpush2.bf16.msra.mxu0 0
      %489 = vmatprep.subr.bf16.mxu0 0
      %490 = vmatpush2.bf16.msra.mxu0 0
      %491 = vmatprep.subr.bf16.mxu0 0
      %492 = vmatpush2.bf16.msra.mxu0 0
      %493 = vmatprep.subr.bf16.mxu0 0
      %494 = vmatpush2.bf16.msra.mxu0 0
      %495 = vmatprep.mubr.bf16.mxu0 0
      %496 = vmatmul.mubr.bf16.gmra.mxu0 %v455
      %v497 = vpop.f32.mrf.mxu0
      %v498 = vadd.f32 0.0, %v497
      %v499 = vpop.f32.mrf.mxu0
      %v500 = vpop.f32.mrf.mxu0
      %v501 = vadd.f32 0.0, %v500
      %v502 = vpop.f32.mrf.mxu0
      %503 = vmatprep.mubr.bf16.mxu0 0
      %504 = vmatmul.mubr.bf16.gmra.mxu0 %v457
      %v505 = vpop.f32.mrf.mxu0
      %v506 = vadd.f32 0.0, %v505
      %v507 = vpop.f32.mrf.mxu0
      %v508 = vpop.f32.mrf.mxu0
      %v509 = vadd.f32 0.0, %v508
      %v510 = vpop.f32.mrf.mxu0
      %511 = vmatprep.mubr.bf16.mxu0 0
      %512 = vmatmul.mubr.bf16.gmra.mxu0 %v459
      %v513 = vpop.f32.mrf.mxu0
      %v514 = vadd.f32 0.0, %v513
      %v515 = vpop.f32.mrf.mxu0
      %v516 = vpop.f32.mrf.mxu0
      %v517 = vadd.f32 0.0, %v516
      %v518 = vpop.f32.mrf.mxu0
      %519 = vmatprep.mubr.bf16.mxu0 0
      %520 = vmatmul.mubr.bf16.gmra.mxu0 %v461
      %v521 = vpop.f32.mrf.mxu0
      %v522 = vadd.f32 0.0, %v521
      %v523 = vpop.f32.mrf.mxu0
      %v524 = vpop.f32.mrf.mxu0
      %v525 = vadd.f32 0.0, %v524
      %v526 = vpop.f32.mrf.mxu0
      %527 = vdwg.mxu0
      %528 = vst [vmem:[#allocation2] sm:$0xff] %v498
      %529 = vst [vmem:[#allocation2 + $0x8] sm:$0xff] %v501
      %530 = vst [vmem:[#allocation2 + $0x10] sm:$0xff] %v506
      %531 = vst [vmem:[#allocation2 + $0x18] sm:$0xff] %v509
      %532 = vst [vmem:[#allocation2 + $0x20] sm:$0xff] %v514
      %533 = vst [vmem:[#allocation2 + $0x28] sm:$0xff] %v517
      %534 = vst [vmem:[#allocation2 + $0x30] sm:$0xff] %v522
      %535 = vst [vmem:[#allocation2 + $0x38] sm:$0xff] %v525
      %v536 = vld [vmem:[#allocation2] sm:$0xff]
      %v537 = vld [vmem:[#allocation2 + $0x8] sm:$0xff]
      %v538 = vld [vmem:[#allocation2 + $0x10] sm:$0xff]
      %v539 = vld [vmem:[#allocation2 + $0x18] sm:$0xff]
      %v540 = vld [vmem:[#allocation2 + $0x20] sm:$0xff]
      %v541 = vld [vmem:[#allocation2 + $0x28] sm:$0xff]
      %v542 = vld [vmem:[#allocation2 + $0x30] sm:$0xff]
      %v543 = vld [vmem:[#allocation2 + $0x38] sm:$0xff]
      %v544 = vadd.f32 %v536, %v537
      %v545 = vadd.f32 %v544, %v538
      %v546 = vadd.f32 %v545, %v539
      %v547 = vadd.f32 %v546, %v540
      %v548 = vadd.f32 %v547, %v541
      %v549 = vadd.f32 %v548, %v542
      %v550 = vadd.f32 %v549, %v543
      %v551 = vrot.slane %v550, 4
      %v552 = vadd.f32 %v550, %v551
      %v553 = vrot.slane %v552, 2
      %v554 = vadd.f32 %v552, %v553
      %v555 = vrot.slane %v554, 1
      %v556 = vadd.f32 %v554, %v555
      %v557 = vmul.f32 %v536, %v536
      %v558 = vmul.f32 %v537, %v537
      %v559 = vmul.f32 %v538, %v538
      %v560 = vmul.f32 %v539, %v539
      %v561 = vmul.f32 %v540, %v540
      %v562 = vmul.f32 %v541, %v541
      %v563 = vmul.f32 %v542, %v542
      %v564 = vmul.f32 %v543, %v543
      %v565 = vadd.f32 %v557, %v558
      %v566 = vadd.f32 %v565, %v559
      %v567 = vadd.f32 %v566, %v560
      %v568 = vadd.f32 %v567, %v561
      %v569 = vadd.f32 %v568, %v562
      %v570 = vadd.f32 %v569, %v563
      %v571 = vadd.f32 %v570, %v564
      %v572 = vrot.slane %v571, 4
      %v573 = vadd.f32 %v571, %v572
      %v574 = vrot.slane %v573, 2
      %v575 = vadd.f32 %v573, %v574
      %v576 = vrot.slane %v575, 1
      %v577 = vadd.f32 %v575, %v576
      %vm578 = vcmask 1040384
      %v579 = vsel %vm578, %v556, %v577
      %580 = vst [vmem:[%s175] sm:$0x3] %v579
      %p581 = scmp.lt.s32.totalorder %s17, 1
      %s582 = scalar_select %p581, %s17, 1
      %p583 = scmp.lt.s32.totalorder %s18, 0
      %s584 = scalar_select %p583, %s18, 0
      %s585 = sadd.s32 %s584, %s582
      %s586 = smul.addr %s585, 2
      %s587 = scalar_lea.vmem %s2, %s586
      // Predicated region
      $region29: #{conv_downsample.2} parent=27 // pred_check
        %p588 = pneg %p94
      $region30: #{conv_downsample.2} parent=27 // pred_check_branch
        %590 = sbr.rel (%p588) target = $region32
      $region31: #{conv_downsample.2} parent=27 // pred_region
        _
      $region32: #{conv_downsample.2} parent=27 // pred_fallthru
        _
    $region28: #{conv_downsample.2} parent=5 // pred_fallthru
      _
    %p591 = scmp.le.s32.totalorder 2, %s8
    // Predicated region
    $region33: #{conv_downsample.2} parent=5 // pred_check
      %p592 = pneg %p591
    $region34: #{conv_downsample.2} parent=5 // pred_check_branch
      %594 = sbr.rel (%p592) target = $region36
    $region35: #{conv_downsample.2} parent=5 // pred_region
      %s595 = ssub.s32 %s8, 2
      // Predicated region
      $region37: #{conv_downsample.2} parent=35 // pred_check
        %p596 = pneg %p100
      $region38: #{conv_downsample.2} parent=35 // pred_check_branch
        %598 = sbr.rel (%p596) target = $region40
      $region39: #{conv_downsample.2} parent=35 // pred_region
        %p599 = scmp.lt.s32.totalorder %s19, 1
        %s600 = scalar_select %p599, %s19, 1
        %p601 = scmp.lt.s32.totalorder %s20, 0
        %s602 = scalar_select %p601, %s20, 0
        %s603 = sadd.s32 %s602, %s600
        %s604 = smul.addr %s603, 2
        %s605 = scalar_lea.vmem %s2, %s604
      $region40: #{conv_downsample.2} parent=35 // pred_fallthru
        _
    $region36: #{conv_downsample.2} parent=5 // pred_fallthru
      _
  $region6: #{conv_downsample.2} parent=0 // loop_footer
    %s12 = sadd.s32 1, %s8
  $region7: #{conv_downsample.2} parent=0 // loop_footer_branch
    %7 = sbr.rel target = $region3
  $region8: #{conv_downsample.2} parent=0 // loop_exit
    _

</llo_original>
